<compile_context>
chip_gen: v5e
topology: v5e:2x2
jax: 0.10.0
libtpu: 0.0.40
codegen_flags: <defaults>
</compile_context>

<pallas_src>
import jax
import jax.numpy as jnp
from jax import lax
from jax.experimental import pallas as pl
from jax.experimental.pallas import tpu as pltpu


def _lstm_recurrence_kernel(xproj_ref, whh_ref, h_out_ref, c_out_ref):
    """Single-invocation LSTM recurrence.

    xproj_ref: (T, B, 4H) precomputed x_t @ Wih^T + (b_ih + b_hh)
    whh_ref:   (H, 4H)    recurrent weights (transposed), VMEM-resident
    h_out_ref, c_out_ref: (B, H) final hidden / cell state
    """
    T = xproj_ref.shape[0]
    B = xproj_ref.shape[1]
    H = whh_ref.shape[0]

    # Load the recurrent weights once; reused by every (unrolled) time step.
    whh = whh_ref[...]

    def step(t, carry):
        h, c = carry
        # Single recurrent matmul on the critical path: (B, H) @ (H, 4H) -> MXU.
        gates = xproj_ref[t] + jnp.dot(h, whh, preferred_element_type=jnp.float32)
        # PyTorch gate order [i, f, g, o]; sigmoid/tanh go to the EUP slot,
        # elementwise products stay on the VPU.
        i_g = jax.nn.sigmoid(gates[:, 0 * H:1 * H])
        f_g = jax.nn.sigmoid(gates[:, 1 * H:2 * H])
        g_g = jnp.tanh(gates[:, 2 * H:3 * H])
        o_g = jax.nn.sigmoid(gates[:, 3 * H:4 * H])
        c_new = f_g * c + i_g * g_g
        h_new = o_g * jnp.tanh(c_new)
        return (h_new, c_new)

    h0 = jnp.zeros((B, H), jnp.float32)
    c0 = jnp.zeros((B, H), jnp.float32)
    # Fully unrolled in-kernel loop: no per-step grid / DMA bookkeeping, and the
    # scheduler can interleave consecutive steps' MXU pushes and gate math.
    h_fin, c_fin = lax.fori_loop(0, T, step, (h0, c0), unroll=True)

    h_out_ref[...] = h_fin.astype(h_out_ref.dtype)
    c_out_ref[...] = c_fin.astype(c_out_ref.dtype)


def encoder_forward(x_tokens, emb_table, w_ih, w_hh, b_ih, b_hh):
    """
    x_tokens:  (B, T) int32 token ids
    emb_table: (en_len, E)
    w_ih:      (4H, E)   PyTorch weight_ih_l0
    w_hh:      (4H, H)   PyTorch weight_hh_l0
    b_ih,b_hh: (4H,)
    returns (h0, c0), each (1, B, H)   [matches nn.LSTM with num_layers=1]
    """
    B, T = x_tokens.shape
    E = emb_table.shape[1]
    H = w_hh.shape[1]

    # Embedding lookup (gather glue) -> time-major (T, B, E).
    x_emb = jnp.take(emb_table, x_tokens, axis=0)                    # (B, T, E)
    x_emb = jnp.transpose(x_emb, (1, 0, 2)).astype(jnp.float32)      # (T, B, E)

    # Hoisted non-recurrent input projection with both biases folded in:
    # one (T*B, E) @ (E, 4H) matmul, reshaped back to (T, B, 4H).
    wih_t = jnp.transpose(w_ih).astype(jnp.float32)                  # (E, 4H)
    whh_t = jnp.transpose(w_hh).astype(jnp.float32)                  # (H, 4H)
    bias = (b_ih + b_hh).astype(jnp.float32)                         # (4H,)
    x_proj = (x_emb.reshape(T * B, E) @ wih_t + bias).reshape(T, B, 4 * H)

    h_final, c_final = pl.pallas_call(
        _lstm_recurrence_kernel,
        out_shape=(
            jax.ShapeDtypeStruct((B, H), jnp.float32),
            jax.ShapeDtypeStruct((B, H), jnp.float32),
        ),
        in_specs=[
            pl.BlockSpec(memory_space=pltpu.MemorySpace.VMEM),  # x_proj (T, B, 4H)
            pl.BlockSpec(memory_space=pltpu.MemorySpace.VMEM),  # Whh^T  (H, 4H)
        ],
        out_specs=(
            pl.BlockSpec(memory_space=pltpu.MemorySpace.VMEM),
            pl.BlockSpec(memory_space=pltpu.MemorySpace.VMEM),
        ),
    )(x_proj, whh_t)

    # PyTorch returns (num_layers=1, B, H).
    return h_final[None, :, :], c_final[None, :, :]


def _reference_forward(x_tokens, emb_table, w_ih, w_hh, b_ih, b_hh):
    """Pure-JAX reference (lax.scan LSTM) for correctness check."""
    B, T = x_tokens.shape
    H = w_hh.shape[1]
    x_emb = jnp.take(emb_table, x_tokens, axis=0).astype(jnp.float32)  # (B, T, E)
    bias = (b_ih + b_hh).astype(jnp.float32)

    def step(carry, x_t):
        h, c = carry
        gates = x_t @ w_ih.T + h @ w_hh.T + bias
        i_g = jax.nn.sigmoid(gates[:, 0 * H:1 * H])
        f_g = jax.nn.sigmoid(gates[:, 1 * H:2 * H])
        g_g = jnp.tanh(gates[:, 2 * H:3 * H])
        o_g = jax.nn.sigmoid(gates[:, 3 * H:4 * H])
        c = f_g * c + i_g * g_g
        h = o_g * jnp.tanh(c)
        return (h, c), None

    init = (jnp.zeros((B, H), jnp.float32), jnp.zeros((B, H), jnp.float32))
    (h, c), _ = jax.lax.scan(step, init, jnp.transpose(x_emb, (1, 0, 2)))
    return h[None], c[None]


if __name__ == "__main__":
    # Small shapes consistent with the module.
    batch = 2
    seq_len = 8
    embedding_dim = 16
    hidden_num = 32
    en_len = 50   # English vocab size

    key = jax.random.PRNGKey(0)
    k_tok, k_emb, k_wih, k_whh, k_bih, k_bhh = jax.random.split(key, 6)

    x_tokens = jax.random.randint(k_tok, (batch, seq_len), 0, en_len, dtype=jnp.int32)

    # Deterministic synthetic parameters (shapes match nn.Embedding / nn.LSTM).
    emb_table = jax.random.normal(k_emb, (en_len, embedding_dim), jnp.float32) * 0.1
    w_ih = jax.random.normal(k_wih, (4 * hidden_num, embedding_dim), jnp.float32) * 0.1
    w_hh = jax.random.normal(k_whh, (4 * hidden_num, hidden_num), jnp.float32) * 0.1
    b_ih = jax.random.normal(k_bih, (4 * hidden_num,), jnp.float32) * 0.1
    b_hh = jax.random.normal(k_bhh, (4 * hidden_num,), jnp.float32) * 0.1

    fwd = jax.jit(encoder_forward)
    h0, c0 = fwd(x_tokens, emb_table, w_ih, w_hh, b_ih, b_hh)
    jax.block_until_ready((h0, c0))

    h_ref, c_ref = _reference_forward(x_tokens, emb_table, w_ih, w_hh, b_ih, b_hh)
    assert h0.shape == (1, batch, hidden_num) and c0.shape == (1, batch, hidden_num)
    assert jnp.allclose(h0, h_ref, rtol=1e-4, atol=1e-4)
    assert jnp.allclose(c0, c_ref, rtol=1e-4, atol=1e-4)

    print("KERNEL_OK")
</pallas_src>

<mosaic_0001>
module attributes {stable_mosaic.version = 11 : i64} {
  func.func @_lstm_recurrence_kernel(%arg0: memref<8x2x128xf32, #tpu.memory_space<vmem>>, %arg1: memref<32x128xf32, #tpu.memory_space<vmem>>, %arg2: memref<2x32xf32, #tpu.memory_space<vmem>>, %arg3: memref<2x32xf32, #tpu.memory_space<vmem>>) attributes {dimension_semantics = [], scalar_prefetch = 0 : i64, scratch_operands = 0 : i64, tpu.core_type = #tpu.core_type<tc>} {
    %c0 = arith.constant 0 : index
    %c0_0 = arith.constant 0 : index
    %0 = vector.load %arg1[%c0, %c0_0] : memref<32x128xf32, #tpu.memory_space<vmem>>, vector<32x128xf32>
    %cst = arith.constant 0.000000e+00 : f32
    %1 = vector.broadcast %cst : f32 to vector<2x32xf32>
    %cst_1 = arith.constant 0.000000e+00 : f32
    %2 = vector.broadcast %cst_1 : f32 to vector<2x32xf32>
    %c0_i32 = arith.constant 0 : i32
    %3 = arith.index_cast %c0_i32 : i32 to index
    %c0_2 = arith.constant 0 : index
    %c0_3 = arith.constant 0 : index
    %4 = vector.load %arg0[%3, %c0_2, %c0_3] : memref<8x2x128xf32, #tpu.memory_space<vmem>>, vector<1x2x128xf32>
    %5 = vector.shape_cast %4 : vector<1x2x128xf32> to vector<2x128xf32>
    %cst_4 = arith.constant dense<0.000000e+00> : vector<2x128xf32>
    %6 = tpu.matmul %1, %0, %cst_4 {dimension_numbers = #tpu.dot_dimension_numbers<[1], [0], [0], [1], [0, 0, 1, 1], [], []>} : vector<2x32xf32>, vector<32x128xf32>, vector<2x128xf32> -> vector<2x128xf32>
    %7 = arith.addf %5, %6 : vector<2x128xf32>
    %8 = vector.extract_strided_slice %7 {offsets = [0, 0], sizes = [2, 32], strides = [1, 1]} : vector<2x128xf32> to vector<2x32xf32>
    %9 = arith.negf %8 : vector<2x32xf32>
    %10 = math.exp %9 : vector<2x32xf32>
    %cst_5 = arith.constant 1.000000e+00 : f32
    %11 = vector.broadcast %cst_5 : f32 to vector<2x32xf32>
    %12 = arith.addf %11, %10 : vector<2x32xf32>
    %13 = arith.divf %11, %12 : vector<2x32xf32>
    %14 = vector.extract_strided_slice %7 {offsets = [0, 32], sizes = [2, 32], strides = [1, 1]} : vector<2x128xf32> to vector<2x32xf32>
    %15 = arith.negf %14 : vector<2x32xf32>
    %16 = math.exp %15 : vector<2x32xf32>
    %cst_6 = arith.constant 1.000000e+00 : f32
    %17 = vector.broadcast %cst_6 : f32 to vector<2x32xf32>
    %18 = arith.addf %17, %16 : vector<2x32xf32>
    %19 = arith.divf %17, %18 : vector<2x32xf32>
    %20 = vector.extract_strided_slice %7 {offsets = [0, 64], sizes = [2, 32], strides = [1, 1]} : vector<2x128xf32> to vector<2x32xf32>
    %21 = math.tanh %20 : vector<2x32xf32>
    %22 = vector.extract_strided_slice %7 {offsets = [0, 96], sizes = [2, 32], strides = [1, 1]} : vector<2x128xf32> to vector<2x32xf32>
    %23 = arith.negf %22 : vector<2x32xf32>
    %24 = math.exp %23 : vector<2x32xf32>
    %cst_7 = arith.constant 1.000000e+00 : f32
    %25 = vector.broadcast %cst_7 : f32 to vector<2x32xf32>
    %26 = arith.addf %25, %24 : vector<2x32xf32>
    %27 = arith.divf %25, %26 : vector<2x32xf32>
    %28 = arith.mulf %19, %2 : vector<2x32xf32>
    %29 = arith.mulf %13, %21 : vector<2x32xf32>
    %30 = arith.addf %28, %29 : vector<2x32xf32>
    %31 = math.tanh %30 : vector<2x32xf32>
    %32 = arith.mulf %27, %31 : vector<2x32xf32>
    %c1_i32 = arith.constant 1 : i32
    %33 = arith.index_cast %c1_i32 : i32 to index
    %c0_8 = arith.constant 0 : index
    %c0_9 = arith.constant 0 : index
    %34 = vector.load %arg0[%33, %c0_8, %c0_9] : memref<8x2x128xf32, #tpu.memory_space<vmem>>, vector<1x2x128xf32>
    %35 = vector.shape_cast %34 : vector<1x2x128xf32> to vector<2x128xf32>
    %cst_10 = arith.constant dense<0.000000e+00> : vector<2x128xf32>
    %36 = tpu.matmul %32, %0, %cst_10 {dimension_numbers = #tpu.dot_dimension_numbers<[1], [0], [0], [1], [0, 0, 1, 1], [], []>} : vector<2x32xf32>, vector<32x128xf32>, vector<2x128xf32> -> vector<2x128xf32>
    %37 = arith.addf %35, %36 : vector<2x128xf32>
    %38 = vector.extract_strided_slice %37 {offsets = [0, 0], sizes = [2, 32], strides = [1, 1]} : vector<2x128xf32> to vector<2x32xf32>
    %39 = arith.negf %38 : vector<2x32xf32>
    %40 = math.exp %39 : vector<2x32xf32>
    %cst_11 = arith.constant 1.000000e+00 : f32
    %41 = vector.broadcast %cst_11 : f32 to vector<2x32xf32>
    %42 = arith.addf %41, %40 : vector<2x32xf32>
    %43 = arith.divf %41, %42 : vector<2x32xf32>
    %44 = vector.extract_strided_slice %37 {offsets = [0, 32], sizes = [2, 32], strides = [1, 1]} : vector<2x128xf32> to vector<2x32xf32>
    %45 = arith.negf %44 : vector<2x32xf32>
    %46 = math.exp %45 : vector<2x32xf32>
    %cst_12 = arith.constant 1.000000e+00 : f32
    %47 = vector.broadcast %cst_12 : f32 to vector<2x32xf32>
    %48 = arith.addf %47, %46 : vector<2x32xf32>
    %49 = arith.divf %47, %48 : vector<2x32xf32>
    %50 = vector.extract_strided_slice %37 {offsets = [0, 64], sizes = [2, 32], strides = [1, 1]} : vector<2x128xf32> to vector<2x32xf32>
    %51 = math.tanh %50 : vector<2x32xf32>
    %52 = vector.extract_strided_slice %37 {offsets = [0, 96], sizes = [2, 32], strides = [1, 1]} : vector<2x128xf32> to vector<2x32xf32>
    %53 = arith.negf %52 : vector<2x32xf32>
    %54 = math.exp %53 : vector<2x32xf32>
    %cst_13 = arith.constant 1.000000e+00 : f32
    %55 = vector.broadcast %cst_13 : f32 to vector<2x32xf32>
    %56 = arith.addf %55, %54 : vector<2x32xf32>
    %57 = arith.divf %55, %56 : vector<2x32xf32>
    %58 = arith.mulf %49, %30 : vector<2x32xf32>
    %59 = arith.mulf %43, %51 : vector<2x32xf32>
    %60 = arith.addf %58, %59 : vector<2x32xf32>
    %61 = math.tanh %60 : vector<2x32xf32>
    %62 = arith.mulf %57, %61 : vector<2x32xf32>
    %c2_i32 = arith.constant 2 : i32
    %63 = arith.index_cast %c2_i32 : i32 to index
    %c0_14 = arith.constant 0 : index
    %c0_15 = arith.constant 0 : index
    %64 = vector.load %arg0[%63, %c0_14, %c0_15] : memref<8x2x128xf32, #tpu.memory_space<vmem>>, vector<1x2x128xf32>
    %65 = vector.shape_cast %64 : vector<1x2x128xf32> to vector<2x128xf32>
    %cst_16 = arith.constant dense<0.000000e+00> : vector<2x128xf32>
    %66 = tpu.matmul %62, %0, %cst_16 {dimension_numbers = #tpu.dot_dimension_numbers<[1], [0], [0], [1], [0, 0, 1, 1], [], []>} : vector<2x32xf32>, vector<32x128xf32>, vector<2x128xf32> -> vector<2x128xf32>
    %67 = arith.addf %65, %66 : vector<2x128xf32>
    %68 = vector.extract_strided_slice %67 {offsets = [0, 0], sizes = [2, 32], strides = [1, 1]} : vector<2x128xf32> to vector<2x32xf32>
    %69 = arith.negf %68 : vector<2x32xf32>
    %70 = math.exp %69 : vector<2x32xf32>
    %cst_17 = arith.constant 1.000000e+00 : f32
    %71 = vector.broadcast %cst_17 : f32 to vector<2x32xf32>
    %72 = arith.addf %71, %70 : vector<2x32xf32>
    %73 = arith.divf %71, %72 : vector<2x32xf32>
    %74 = vector.extract_strided_slice %67 {offsets = [0, 32], sizes = [2, 32], strides = [1, 1]} : vector<2x128xf32> to vector<2x32xf32>
    %75 = arith.negf %74 : vector<2x32xf32>
    %76 = math.exp %75 : vector<2x32xf32>
    %cst_18 = arith.constant 1.000000e+00 : f32
    %77 = vector.broadcast %cst_18 : f32 to vector<2x32xf32>
    %78 = arith.addf %77, %76 : vector<2x32xf32>
    %79 = arith.divf %77, %78 : vector<2x32xf32>
    %80 = vector.extract_strided_slice %67 {offsets = [0, 64], sizes = [2, 32], strides = [1, 1]} : vector<2x128xf32> to vector<2x32xf32>
    %81 = math.tanh %80 : vector<2x32xf32>
    %82 = vector.extract_strided_slice %67 {offsets = [0, 96], sizes = [2, 32], strides = [1, 1]} : vector<2x128xf32> to vector<2x32xf32>
    %83 = arith.negf %82 : vector<2x32xf32>
    %84 = math.exp %83 : vector<2x32xf32>
    %cst_19 = arith.constant 1.000000e+00 : f32
    %85 = vector.broadcast %cst_19 : f32 to vector<2x32xf32>
    %86 = arith.addf %85, %84 : vector<2x32xf32>
    %87 = arith.divf %85, %86 : vector<2x32xf32>
    %88 = arith.mulf %79, %60 : vector<2x32xf32>
    %89 = arith.mulf %73, %81 : vector<2x32xf32>
    %90 = arith.addf %88, %89 : vector<2x32xf32>
    %91 = math.tanh %90 : vector<2x32xf32>
    %92 = arith.mulf %87, %91 : vector<2x32xf32>
    %c3_i32 = arith.constant 3 : i32
    %93 = arith.index_cast %c3_i32 : i32 to index
    %c0_20 = arith.constant 0 : index
    %c0_21 = arith.constant 0 : index
    %94 = vector.load %arg0[%93, %c0_20, %c0_21] : memref<8x2x128xf32, #tpu.memory_space<vmem>>, vector<1x2x128xf32>
    %95 = vector.shape_cast %94 : vector<1x2x128xf32> to vector<2x128xf32>
    %cst_22 = arith.constant dense<0.000000e+00> : vector<2x128xf32>
    %96 = tpu.matmul %92, %0, %cst_22 {dimension_numbers = #tpu.dot_dimension_numbers<[1], [0], [0], [1], [0, 0, 1, 1], [], []>} : vector<2x32xf32>, vector<32x128xf32>, vector<2x128xf32> -> vector<2x128xf32>
    %97 = arith.addf %95, %96 : vector<2x128xf32>
    %98 = vector.extract_strided_slice %97 {offsets = [0, 0], sizes = [2, 32], strides = [1, 1]} : vector<2x128xf32> to vector<2x32xf32>
    %99 = arith.negf %98 : vector<2x32xf32>
    %100 = math.exp %99 : vector<2x32xf32>
    %cst_23 = arith.constant 1.000000e+00 : f32
    %101 = vector.broadcast %cst_23 : f32 to vector<2x32xf32>
    %102 = arith.addf %101, %100 : vector<2x32xf32>
    %103 = arith.divf %101, %102 : vector<2x32xf32>
    %104 = vector.extract_strided_slice %97 {offsets = [0, 32], sizes = [2, 32], strides = [1, 1]} : vector<2x128xf32> to vector<2x32xf32>
    %105 = arith.negf %104 : vector<2x32xf32>
    %106 = math.exp %105 : vector<2x32xf32>
    %cst_24 = arith.constant 1.000000e+00 : f32
    %107 = vector.broadcast %cst_24 : f32 to vector<2x32xf32>
    %108 = arith.addf %107, %106 : vector<2x32xf32>
    %109 = arith.divf %107, %108 : vector<2x32xf32>
    %110 = vector.extract_strided_slice %97 {offsets = [0, 64], sizes = [2, 32], strides = [1, 1]} : vector<2x128xf32> to vector<2x32xf32>
    %111 = math.tanh %110 : vector<2x32xf32>
    %112 = vector.extract_strided_slice %97 {offsets = [0, 96], sizes = [2, 32], strides = [1, 1]} : vector<2x128xf32> to vector<2x32xf32>
    %113 = arith.negf %112 : vector<2x32xf32>
    %114 = math.exp %113 : vector<2x32xf32>
    %cst_25 = arith.constant 1.000000e+00 : f32
    %115 = vector.broadcast %cst_25 : f32 to vector<2x32xf32>
    %116 = arith.addf %115, %114 : vector<2x32xf32>
    %117 = arith.divf %115, %116 : vector<2x32xf32>
    %118 = arith.mulf %109, %90 : vector<2x32xf32>
    %119 = arith.mulf %103, %111 : vector<2x32xf32>
    %120 = arith.addf %118, %119 : vector<2x32xf32>
    %121 = math.tanh %120 : vector<2x32xf32>
    %122 = arith.mulf %117, %121 : vector<2x32xf32>
    %c4_i32 = arith.constant 4 : i32
    %123 = arith.index_cast %c4_i32 : i32 to index
    %c0_26 = arith.constant 0 : index
    %c0_27 = arith.constant 0 : index
    %124 = vector.load %arg0[%123, %c0_26, %c0_27] : memref<8x2x128xf32, #tpu.memory_space<vmem>>, vector<1x2x128xf32>
    %125 = vector.shape_cast %124 : vector<1x2x128xf32> to vector<2x128xf32>
    %cst_28 = arith.constant dense<0.000000e+00> : vector<2x128xf32>
    %126 = tpu.matmul %122, %0, %cst_28 {dimension_numbers = #tpu.dot_dimension_numbers<[1], [0], [0], [1], [0, 0, 1, 1], [], []>} : vector<2x32xf32>, vector<32x128xf32>, vector<2x128xf32> -> vector<2x128xf32>
    %127 = arith.addf %125, %126 : vector<2x128xf32>
    %128 = vector.extract_strided_slice %127 {offsets = [0, 0], sizes = [2, 32], strides = [1, 1]} : vector<2x128xf32> to vector<2x32xf32>
    %129 = arith.negf %128 : vector<2x32xf32>
    %130 = math.exp %129 : vector<2x32xf32>
    %cst_29 = arith.constant 1.000000e+00 : f32
    %131 = vector.broadcast %cst_29 : f32 to vector<2x32xf32>
    %132 = arith.addf %131, %130 : vector<2x32xf32>
    %133 = arith.divf %131, %132 : vector<2x32xf32>
    %134 = vector.extract_strided_slice %127 {offsets = [0, 32], sizes = [2, 32], strides = [1, 1]} : vector<2x128xf32> to vector<2x32xf32>
    %135 = arith.negf %134 : vector<2x32xf32>
    %136 = math.exp %135 : vector<2x32xf32>
    %cst_30 = arith.constant 1.000000e+00 : f32
    %137 = vector.broadcast %cst_30 : f32 to vector<2x32xf32>
    %138 = arith.addf %137, %136 : vector<2x32xf32>
    %139 = arith.divf %137, %138 : vector<2x32xf32>
    %140 = vector.extract_strided_slice %127 {offsets = [0, 64], sizes = [2, 32], strides = [1, 1]} : vector<2x128xf32> to vector<2x32xf32>
    %141 = math.tanh %140 : vector<2x32xf32>
    %142 = vector.extract_strided_slice %127 {offsets = [0, 96], sizes = [2, 32], strides = [1, 1]} : vector<2x128xf32> to vector<2x32xf32>
    %143 = arith.negf %142 : vector<2x32xf32>
    %144 = math.exp %143 : vector<2x32xf32>
    %cst_31 = arith.constant 1.000000e+00 : f32
    %145 = vector.broadcast %cst_31 : f32 to vector<2x32xf32>
    %146 = arith.addf %145, %144 : vector<2x32xf32>
    %147 = arith.divf %145, %146 : vector<2x32xf32>
    %148 = arith.mulf %139, %120 : vector<2x32xf32>
    %149 = arith.mulf %133, %141 : vector<2x32xf32>
    %150 = arith.addf %148, %149 : vector<2x32xf32>
    %151 = math.tanh %150 : vector<2x32xf32>
    %152 = arith.mulf %147, %151 : vector<2x32xf32>
    %c5_i32 = arith.constant 5 : i32
    %153 = arith.index_cast %c5_i32 : i32 to index
    %c0_32 = arith.constant 0 : index
    %c0_33 = arith.constant 0 : index
    %154 = vector.load %arg0[%153, %c0_32, %c0_33] : memref<8x2x128xf32, #tpu.memory_space<vmem>>, vector<1x2x128xf32>
    %155 = vector.shape_cast %154 : vector<1x2x128xf32> to vector<2x128xf32>
    %cst_34 = arith.constant dense<0.000000e+00> : vector<2x128xf32>
    %156 = tpu.matmul %152, %0, %cst_34 {dimension_numbers = #tpu.dot_dimension_numbers<[1], [0], [0], [1], [0, 0, 1, 1], [], []>} : vector<2x32xf32>, vector<32x128xf32>, vector<2x128xf32> -> vector<2x128xf32>
    %157 = arith.addf %155, %156 : vector<2x128xf32>
    %158 = vector.extract_strided_slice %157 {offsets = [0, 0], sizes = [2, 32], strides = [1, 1]} : vector<2x128xf32> to vector<2x32xf32>
    %159 = arith.negf %158 : vector<2x32xf32>
    %160 = math.exp %159 : vector<2x32xf32>
    %cst_35 = arith.constant 1.000000e+00 : f32
    %161 = vector.broadcast %cst_35 : f32 to vector<2x32xf32>
    %162 = arith.addf %161, %160 : vector<2x32xf32>
    %163 = arith.divf %161, %162 : vector<2x32xf32>
    %164 = vector.extract_strided_slice %157 {offsets = [0, 32], sizes = [2, 32], strides = [1, 1]} : vector<2x128xf32> to vector<2x32xf32>
    %165 = arith.negf %164 : vector<2x32xf32>
    %166 = math.exp %165 : vector<2x32xf32>
    %cst_36 = arith.constant 1.000000e+00 : f32
    %167 = vector.broadcast %cst_36 : f32 to vector<2x32xf32>
    %168 = arith.addf %167, %166 : vector<2x32xf32>
    %169 = arith.divf %167, %168 : vector<2x32xf32>
    %170 = vector.extract_strided_slice %157 {offsets = [0, 64], sizes = [2, 32], strides = [1, 1]} : vector<2x128xf32> to vector<2x32xf32>
    %171 = math.tanh %170 : vector<2x32xf32>
    %172 = vector.extract_strided_slice %157 {offsets = [0, 96], sizes = [2, 32], strides = [1, 1]} : vector<2x128xf32> to vector<2x32xf32>
    %173 = arith.negf %172 : vector<2x32xf32>
    %174 = math.exp %173 : vector<2x32xf32>
    %cst_37 = arith.constant 1.000000e+00 : f32
    %175 = vector.broadcast %cst_37 : f32 to vector<2x32xf32>
    %176 = arith.addf %175, %174 : vector<2x32xf32>
    %177 = arith.divf %175, %176 : vector<2x32xf32>
    %178 = arith.mulf %169, %150 : vector<2x32xf32>
    %179 = arith.mulf %163, %171 : vector<2x32xf32>
    %180 = arith.addf %178, %179 : vector<2x32xf32>
    %181 = math.tanh %180 : vector<2x32xf32>
    %182 = arith.mulf %177, %181 : vector<2x32xf32>
    %c6_i32 = arith.constant 6 : i32
    %183 = arith.index_cast %c6_i32 : i32 to index
    %c0_38 = arith.constant 0 : index
    %c0_39 = arith.constant 0 : index
    %184 = vector.load %arg0[%183, %c0_38, %c0_39] : memref<8x2x128xf32, #tpu.memory_space<vmem>>, vector<1x2x128xf32>
    %185 = vector.shape_cast %184 : vector<1x2x128xf32> to vector<2x128xf32>
    %cst_40 = arith.constant dense<0.000000e+00> : vector<2x128xf32>
    %186 = tpu.matmul %182, %0, %cst_40 {dimension_numbers = #tpu.dot_dimension_numbers<[1], [0], [0], [1], [0, 0, 1, 1], [], []>} : vector<2x32xf32>, vector<32x128xf32>, vector<2x128xf32> -> vector<2x128xf32>
    %187 = arith.addf %185, %186 : vector<2x128xf32>
    %188 = vector.extract_strided_slice %187 {offsets = [0, 0], sizes = [2, 32], strides = [1, 1]} : vector<2x128xf32> to vector<2x32xf32>
    %189 = arith.negf %188 : vector<2x32xf32>
    %190 = math.exp %189 : vector<2x32xf32>
    %cst_41 = arith.constant 1.000000e+00 : f32
    %191 = vector.broadcast %cst_41 : f32 to vector<2x32xf32>
    %192 = arith.addf %191, %190 : vector<2x32xf32>
    %193 = arith.divf %191, %192 : vector<2x32xf32>
    %194 = vector.extract_strided_slice %187 {offsets = [0, 32], sizes = [2, 32], strides = [1, 1]} : vector<2x128xf32> to vector<2x32xf32>
    %195 = arith.negf %194 : vector<2x32xf32>
    %196 = math.exp %195 : vector<2x32xf32>
    %cst_42 = arith.constant 1.000000e+00 : f32
    %197 = vector.broadcast %cst_42 : f32 to vector<2x32xf32>
    %198 = arith.addf %197, %196 : vector<2x32xf32>
    %199 = arith.divf %197, %198 : vector<2x32xf32>
    %200 = vector.extract_strided_slice %187 {offsets = [0, 64], sizes = [2, 32], strides = [1, 1]} : vector<2x128xf32> to vector<2x32xf32>
    %201 = math.tanh %200 : vector<2x32xf32>
    %202 = vector.extract_strided_slice %187 {offsets = [0, 96], sizes = [2, 32], strides = [1, 1]} : vector<2x128xf32> to vector<2x32xf32>
    %203 = arith.negf %202 : vector<2x32xf32>
    %204 = math.exp %203 : vector<2x32xf32>
    %cst_43 = arith.constant 1.000000e+00 : f32
    %205 = vector.broadcast %cst_43 : f32 to vector<2x32xf32>
    %206 = arith.addf %205, %204 : vector<2x32xf32>
    %207 = arith.divf %205, %206 : vector<2x32xf32>
    %208 = arith.mulf %199, %180 : vector<2x32xf32>
    %209 = arith.mulf %193, %201 : vector<2x32xf32>
    %210 = arith.addf %208, %209 : vector<2x32xf32>
    %211 = math.tanh %210 : vector<2x32xf32>
    %212 = arith.mulf %207, %211 : vector<2x32xf32>
    %c7_i32 = arith.constant 7 : i32
    %213 = arith.index_cast %c7_i32 : i32 to index
    %c0_44 = arith.constant 0 : index
    %c0_45 = arith.constant 0 : index
    %214 = vector.load %arg0[%213, %c0_44, %c0_45] : memref<8x2x128xf32, #tpu.memory_space<vmem>>, vector<1x2x128xf32>
    %215 = vector.shape_cast %214 : vector<1x2x128xf32> to vector<2x128xf32>
    %cst_46 = arith.constant dense<0.000000e+00> : vector<2x128xf32>
    %216 = tpu.matmul %212, %0, %cst_46 {dimension_numbers = #tpu.dot_dimension_numbers<[1], [0], [0], [1], [0, 0, 1, 1], [], []>} : vector<2x32xf32>, vector<32x128xf32>, vector<2x128xf32> -> vector<2x128xf32>
    %217 = arith.addf %215, %216 : vector<2x128xf32>
    %218 = vector.extract_strided_slice %217 {offsets = [0, 0], sizes = [2, 32], strides = [1, 1]} : vector<2x128xf32> to vector<2x32xf32>
    %219 = arith.negf %218 : vector<2x32xf32>
    %220 = math.exp %219 : vector<2x32xf32>
    %cst_47 = arith.constant 1.000000e+00 : f32
    %221 = vector.broadcast %cst_47 : f32 to vector<2x32xf32>
    %222 = arith.addf %221, %220 : vector<2x32xf32>
    %223 = arith.divf %221, %222 : vector<2x32xf32>
    %224 = vector.extract_strided_slice %217 {offsets = [0, 32], sizes = [2, 32], strides = [1, 1]} : vector<2x128xf32> to vector<2x32xf32>
    %225 = arith.negf %224 : vector<2x32xf32>
    %226 = math.exp %225 : vector<2x32xf32>
    %cst_48 = arith.constant 1.000000e+00 : f32
    %227 = vector.broadcast %cst_48 : f32 to vector<2x32xf32>
    %228 = arith.addf %227, %226 : vector<2x32xf32>
    %229 = arith.divf %227, %228 : vector<2x32xf32>
    %230 = vector.extract_strided_slice %217 {offsets = [0, 64], sizes = [2, 32], strides = [1, 1]} : vector<2x128xf32> to vector<2x32xf32>
    %231 = math.tanh %230 : vector<2x32xf32>
    %232 = vector.extract_strided_slice %217 {offsets = [0, 96], sizes = [2, 32], strides = [1, 1]} : vector<2x128xf32> to vector<2x32xf32>
    %233 = arith.negf %232 : vector<2x32xf32>
    %234 = math.exp %233 : vector<2x32xf32>
    %cst_49 = arith.constant 1.000000e+00 : f32
    %235 = vector.broadcast %cst_49 : f32 to vector<2x32xf32>
    %236 = arith.addf %235, %234 : vector<2x32xf32>
    %237 = arith.divf %235, %236 : vector<2x32xf32>
    %238 = arith.mulf %229, %210 : vector<2x32xf32>
    %239 = arith.mulf %223, %231 : vector<2x32xf32>
    %240 = arith.addf %238, %239 : vector<2x32xf32>
    %241 = math.tanh %240 : vector<2x32xf32>
    %242 = arith.mulf %237, %241 : vector<2x32xf32>
    %c8_i32 = arith.constant 8 : i32
    %c0_50 = arith.constant 0 : index
    %c0_51 = arith.constant 0 : index
    %243 = vector.load %arg2[%c0_50, %c0_51] : memref<2x32xf32, #tpu.memory_space<vmem>>, vector<2x32xf32>
    tpu.vector_store %arg2[%c0_50, %c0_51], %242 {strides = array<i32>} : memref<2x32xf32, #tpu.memory_space<vmem>>, vector<2x32xf32>,
    %c0_52 = arith.constant 0 : index
    %c0_53 = arith.constant 0 : index
    %244 = vector.load %arg3[%c0_52, %c0_53] : memref<2x32xf32, #tpu.memory_space<vmem>>, vector<2x32xf32>
    tpu.vector_store %arg3[%c0_52, %c0_53], %240 {strides = array<i32>} : memref<2x32xf32, #tpu.memory_space<vmem>>, vector<2x32xf32>,
    return
  }
}

</mosaic_0001>

<llo_original>
// kernel: encoder_forward.1
$region0: #{encoder_forward.1}
  #allocation0 [shape = 'u32[]', space=smem, size = 0x4, offset = 0x4, fixed_abs, tag = 'smem constant byte address 0x4 - core index']
  #allocation1 [shape = 'u32[72,128]{1,0:T(1,128)}', space=vmem, size = 0x9000, scoped, tag = 'internal scratch']
  %s0 = inlined_call_operand.vmem [shape: f32[8,2,128], index: 0, kind: input, shape index: {}]
  %s1 = inlined_call_operand.vmem [shape: f32[32,128], index: 1, kind: input, shape index: {}]
  %s2 = inlined_call_operand.hbm [shape: f32[2,32], index: 2, kind: output, shape index: {0}]
  %s3 = inlined_call_operand.hbm [shape: f32[2,32], index: 3, kind: output, shape index: {1}]
  %4 = xla_tuple %s2, %s3
  %s5 = sld [smem:[#allocation0]]
  $region26: #{encoder_forward.1} parent=0
    _
  %s7 = ssub.s32 1, %s5
  %s8 = scalar_select 0, %s7, %s5
  $region1: #{encoder_forward.1} parent=0
    #allocation2 [shape = 'u8[1024]{0}', space=vmem, size = 0x400, scoped, tag = 'output window, operand 0, single buffered']
    #allocation3 [shape = 's32[1]{0}', space=sflag, size = 0x4, scoped, tag = 'scoped memory for encoder_forward.1']
    #allocation4 [shape = 'u8[1024]{0}', space=vmem, size = 0x400, scoped, tag = 'output window, operand 1, single buffered']
    #allocation5 [shape = 's32[1]{0}', space=sflag, size = 0x4, scoped, tag = 'scoped memory for encoder_forward.1']
    %9 = vsyncpa [#allocation3], 0
    %10 = vsyncpa [#allocation5], 0
    // Predicated region
    $region2: #{encoder_forward.1} parent=1 // pred_check
      _
    $region3: #{encoder_forward.1} parent=1 // pred_check_branch
      %12 = sbr.rel (0) target = $region5
    $region4: #{encoder_forward.1} parent=1 // pred_region
      _
    $region5: #{encoder_forward.1} parent=1 // pred_fallthru
      _
    // Predicated region
    $region6: #{encoder_forward.1} parent=1 // pred_check
      _
    $region7: #{encoder_forward.1} parent=1 // pred_check_branch
      %14 = sbr.rel (0) target = $region9
    $region8: #{encoder_forward.1} parent=1 // pred_region
      _
    $region9: #{encoder_forward.1} parent=1 // pred_fallthru
      _
    %v15 = vld [vmem:[%s1] sm:$0xff]
    %v16 = vld [vmem:[%s1 + $0x8] sm:$0xff]
    %v17 = vld [vmem:[%s1 + $0x10] sm:$0xff]
    %v18 = vld [vmem:[%s1 + $0x18] sm:$0xff]
    %v19 = vld [vmem:[%s0] sm:$0x3]
    %vm20 = vcmask 261120
    %v22 = vsel %vm20, 0.0, 0
    %24 = vmatpush.msra.mxu0 0.0
    %25 = vmatpush.msra.mxu0 0.0
    %26 = vmatpush.msra.mxu0 0.0
    %27 = vmatpush.msra.mxu0 0.0
    %28 = vmatpush.msra.mxu0 0.0
    %29 = vmatpush.msra.mxu0 0.0
    %30 = vmatpush.msra.mxu0 0.0
    %31 = vmatpush.msra.mxu0 0.0
    %32 = vmatpush.msra.mxu0 0.0
    %33 = vmatpush.msra.mxu0 0.0
    %34 = vmatpush.msra.mxu0 0.0
    %35 = vmatpush.msra.mxu0 0.0
    %36 = vmatpush.msra.mxu0 %v18
    %37 = vmatpush.msra.mxu0 %v17
    %38 = vmatpush.msra.mxu0 %v16
    %39 = vmatpush.msra.mxu0 %v15
    %40 = vmatmul.f32.gmra.mxu0 %v22
    %v41 = vpop.f32.mrf.mxu0
    %v42 = vadd.f32 0.0, %v41
    %43 = vdwg.mxu0
    %v44 = vadd.f32 %v19, %v42
    %v45 = vxor.u32 %v44, 2147483648
    %v46 = vmul.f32 %v45, 1.442695
    %v47 = vpow.pop %v46
    %v48 = vadd.f32 %v47, 1.0
    %v49 = vrcp.pop %v48
    %v50 = vmul.f32 %v48, %v49
    %v51 = vsub.f32 1.0, %v50
    %v52 = vmul.f32 %v49, %v51
    %v53 = vadd.f32 %v49, %v52
    %vm54 = vweird.f32 %v48
    %vm55 = vweird.f32 %v49
    %vm56 = vmor %vm54, %vm55
    %v57 = vsel %vm56, %v49, %v53
    %v58 = vand.u32 2147483647, %v48
    %vm59 = vcmp.eq.f32.partialorder %v58, 8.507059e+37
    %v60 = vand.u32 %v48, 2147483648
    %v61 = vor.u32 1.1754944e-38, %v60
    %v62 = vsel %vm59, %v61, %v57
    %v63 = vmul.f32 1.0, %v62
    %v64 = vtanh.pop %v44
    %v65 = vmul.f32 %v63, 0.0
    %67 = vrot.lane.b32.xlu0 %v64, 64
    %v68 = vpop.permute.xlu0 %67
    %v70 = vmul.f32 %v63, %v68
    %72 = vrot.lane.b32.xlu0 %v70, 32
    %v73 = vpop.permute.xlu0 %72
    %v75 = vadd.f32 %v65, %v73
    %v76 = vtanh.pop %v75
    %78 = vrot.lane.b32.xlu0 %v76, 64
    %v79 = vpop.permute.xlu0 %78
    %v81 = vmul.f32 %v63, %v79
    %s82 = scalar_lea.vmem %s0, 2
    %v83 = vld [vmem:[%s82] sm:$0x3]
    %85 = vrot.lane.b32.xlu0 %v81, 32
    %v86 = vpop.permute.xlu0 %85
    %v87 = vsel %vm20, %v86, 0
    %89 = vmatpush.msra.mxu0 0.0
    %90 = vmatpush.msra.mxu0 0.0
    %91 = vmatpush.msra.mxu0 0.0
    %92 = vmatpush.msra.mxu0 0.0
    %93 = vmatpush.msra.mxu0 0.0
    %94 = vmatpush.msra.mxu0 0.0
    %95 = vmatpush.msra.mxu0 0.0
    %96 = vmatpush.msra.mxu0 0.0
    %97 = vmatpush.msra.mxu0 0.0
    %98 = vmatpush.msra.mxu0 0.0
    %99 = vmatpush.msra.mxu0 0.0
    %100 = vmatpush.msra.mxu0 0.0
    %101 = vmatpush.msra.mxu0 %v18
    %102 = vmatpush.msra.mxu0 %v17
    %103 = vmatpush.msra.mxu0 %v16
    %104 = vmatpush.msra.mxu0 %v15
    %105 = vmatmul.f32.gmra.mxu0 %v87
    %v106 = vpop.f32.mrf.mxu0
    %v107 = vadd.f32 0.0, %v106
    %108 = vdwg.mxu0
    %v109 = vadd.f32 %v83, %v107
    %v110 = vxor.u32 %v109, 2147483648
    %v111 = vmul.f32 %v110, 1.442695
    %v112 = vpow.pop %v111
    %v113 = vadd.f32 %v112, 1.0
    %v114 = vrcp.pop %v113
    %v115 = vmul.f32 %v113, %v114
    %v116 = vsub.f32 1.0, %v115
    %v117 = vmul.f32 %v114, %v116
    %v118 = vadd.f32 %v114, %v117
    %vm119 = vweird.f32 %v113
    %vm120 = vweird.f32 %v114
    %vm121 = vmor %vm119, %vm120
    %v122 = vsel %vm121, %v114, %v118
    %v123 = vand.u32 2147483647, %v113
    %vm124 = vcmp.eq.f32.partialorder %v123, 8.507059e+37
    %v125 = vand.u32 %v113, 2147483648
    %v126 = vor.u32 1.1754944e-38, %v125
    %v127 = vsel %vm124, %v126, %v122
    %v128 = vmul.f32 1.0, %v127
    %v129 = vtanh.pop %v109
    %v130 = vmul.f32 %v128, %v75
    %132 = vrot.lane.b32.xlu0 %v129, 64
    %v133 = vpop.permute.xlu0 %132
    %v135 = vmul.f32 %v128, %v133
    %137 = vrot.lane.b32.xlu0 %v135, 32
    %v138 = vpop.permute.xlu0 %137
    %v140 = vadd.f32 %v130, %v138
    %v141 = vtanh.pop %v140
    %143 = vrot.lane.b32.xlu0 %v141, 64
    %v144 = vpop.permute.xlu0 %143
    %v146 = vmul.f32 %v128, %v144
    %s147 = scalar_lea.vmem %s0, 4
    %v148 = vld [vmem:[%s147] sm:$0x3]
    %150 = vrot.lane.b32.xlu0 %v146, 32
    %v151 = vpop.permute.xlu0 %150
    %v152 = vsel %vm20, %v151, 0
    %154 = vmatpush.msra.mxu0 0.0
    %155 = vmatpush.msra.mxu0 0.0
    %156 = vmatpush.msra.mxu0 0.0
    %157 = vmatpush.msra.mxu0 0.0
    %158 = vmatpush.msra.mxu0 0.0
    %159 = vmatpush.msra.mxu0 0.0
    %160 = vmatpush.msra.mxu0 0.0
    %161 = vmatpush.msra.mxu0 0.0
    %162 = vmatpush.msra.mxu0 0.0
    %163 = vmatpush.msra.mxu0 0.0
    %164 = vmatpush.msra.mxu0 0.0
    %165 = vmatpush.msra.mxu0 0.0
    %166 = vmatpush.msra.mxu0 %v18
    %167 = vmatpush.msra.mxu0 %v17
    %168 = vmatpush.msra.mxu0 %v16
    %169 = vmatpush.msra.mxu0 %v15
    %170 = vmatmul.f32.gmra.mxu0 %v152
    %v171 = vpop.f32.mrf.mxu0
    %v172 = vadd.f32 0.0, %v171
    %173 = vdwg.mxu0
    %v174 = vadd.f32 %v148, %v172
    %v175 = vxor.u32 %v174, 2147483648
    %v176 = vmul.f32 %v175, 1.442695
    %v177 = vpow.pop %v176
    %v178 = vadd.f32 %v177, 1.0
    %v179 = vrcp.pop %v178
    %v180 = vmul.f32 %v178, %v179
    %v181 = vsub.f32 1.0, %v180
    %v182 = vmul.f32 %v179, %v181
    %v183 = vadd.f32 %v179, %v182
    %vm184 = vweird.f32 %v178
    %vm185 = vweird.f32 %v179
    %vm186 = vmor %vm184, %vm185
    %v187 = vsel %vm186, %v179, %v183
    %v188 = vand.u32 2147483647, %v178
    %vm189 = vcmp.eq.f32.partialorder %v188, 8.507059e+37
    %v190 = vand.u32 %v178, 2147483648
    %v191 = vor.u32 1.1754944e-38, %v190
    %v192 = vsel %vm189, %v191, %v187
    %v193 = vmul.f32 1.0, %v192
    %v194 = vtanh.pop %v174
    %v195 = vmul.f32 %v193, %v140
    %197 = vrot.lane.b32.xlu0 %v194, 64
    %v198 = vpop.permute.xlu0 %197
    %v200 = vmul.f32 %v193, %v198
    %202 = vrot.lane.b32.xlu0 %v200, 32
    %v203 = vpop.permute.xlu0 %202
    %v205 = vadd.f32 %v195, %v203
    %v206 = vtanh.pop %v205
    %208 = vrot.lane.b32.xlu0 %v206, 64
    %v209 = vpop.permute.xlu0 %208
    %v211 = vmul.f32 %v193, %v209
    %s212 = scalar_lea.vmem %s0, 6
    %v213 = vld [vmem:[%s212] sm:$0x3]
    %215 = vrot.lane.b32.xlu0 %v211, 32
    %v216 = vpop.permute.xlu0 %215
    %v217 = vsel %vm20, %v216, 0
    %219 = vmatpush.msra.mxu0 0.0
    %220 = vmatpush.msra.mxu0 0.0
    %221 = vmatpush.msra.mxu0 0.0
    %222 = vmatpush.msra.mxu0 0.0
    %223 = vmatpush.msra.mxu0 0.0
    %224 = vmatpush.msra.mxu0 0.0
    %225 = vmatpush.msra.mxu0 0.0
    %226 = vmatpush.msra.mxu0 0.0
    %227 = vmatpush.msra.mxu0 0.0
    %228 = vmatpush.msra.mxu0 0.0
    %229 = vmatpush.msra.mxu0 0.0
    %230 = vmatpush.msra.mxu0 0.0
    %231 = vmatpush.msra.mxu0 %v18
    %232 = vmatpush.msra.mxu0 %v17
    %233 = vmatpush.msra.mxu0 %v16
    %234 = vmatpush.msra.mxu0 %v15
    %235 = vmatmul.f32.gmra.mxu0 %v217
    %v236 = vpop.f32.mrf.mxu0
    %v237 = vadd.f32 0.0, %v236
    %238 = vdwg.mxu0
    %v239 = vadd.f32 %v213, %v237
    %v240 = vxor.u32 %v239, 2147483648
    %v241 = vmul.f32 %v240, 1.442695
    %v242 = vpow.pop %v241
    %v243 = vadd.f32 %v242, 1.0
    %v244 = vrcp.pop %v243
    %v245 = vmul.f32 %v243, %v244
    %v246 = vsub.f32 1.0, %v245
    %v247 = vmul.f32 %v244, %v246
    %v248 = vadd.f32 %v244, %v247
    %vm249 = vweird.f32 %v243
    %vm250 = vweird.f32 %v244
    %vm251 = vmor %vm249, %vm250
    %v252 = vsel %vm251, %v244, %v248
    %v253 = vand.u32 2147483647, %v243
    %vm254 = vcmp.eq.f32.partialorder %v253, 8.507059e+37
    %v255 = vand.u32 %v243, 2147483648
    %v256 = vor.u32 1.1754944e-38, %v255
    %v257 = vsel %vm254, %v256, %v252
    %v258 = vmul.f32 1.0, %v257
    %v259 = vtanh.pop %v239
    %v260 = vmul.f32 %v258, %v205
    %262 = vrot.lane.b32.xlu0 %v259, 64
    %v263 = vpop.permute.xlu0 %262
    %v265 = vmul.f32 %v258, %v263
    %267 = vrot.lane.b32.xlu0 %v265, 32
    %v268 = vpop.permute.xlu0 %267
    %v270 = vadd.f32 %v260, %v268
    %v271 = vtanh.pop %v270
    %273 = vrot.lane.b32.xlu0 %v271, 64
    %v274 = vpop.permute.xlu0 %273
    %v276 = vmul.f32 %v258, %v274
    %s277 = scalar_lea.vmem %s0, 8
    %v278 = vld [vmem:[%s277] sm:$0x3]
    %280 = vrot.lane.b32.xlu0 %v276, 32
    %v281 = vpop.permute.xlu0 %280
    %v282 = vsel %vm20, %v281, 0
    %284 = vmatpush.msra.mxu0 0.0
    %285 = vmatpush.msra.mxu0 0.0
    %286 = vmatpush.msra.mxu0 0.0
    %287 = vmatpush.msra.mxu0 0.0
    %288 = vmatpush.msra.mxu0 0.0
    %289 = vmatpush.msra.mxu0 0.0
    %290 = vmatpush.msra.mxu0 0.0
    %291 = vmatpush.msra.mxu0 0.0
    %292 = vmatpush.msra.mxu0 0.0
    %293 = vmatpush.msra.mxu0 0.0
    %294 = vmatpush.msra.mxu0 0.0
    %295 = vmatpush.msra.mxu0 0.0
    %296 = vmatpush.msra.mxu0 %v18
    %297 = vmatpush.msra.mxu0 %v17
    %298 = vmatpush.msra.mxu0 %v16
    %299 = vmatpush.msra.mxu0 %v15
    %300 = vmatmul.f32.gmra.mxu0 %v282
    %v301 = vpop.f32.mrf.mxu0
    %v302 = vadd.f32 0.0, %v301
    %303 = vdwg.mxu0
    %v304 = vadd.f32 %v278, %v302
    %v305 = vxor.u32 %v304, 2147483648
    %v306 = vmul.f32 %v305, 1.442695
    %v307 = vpow.pop %v306
    %v308 = vadd.f32 %v307, 1.0
    %v309 = vrcp.pop %v308
    %v310 = vmul.f32 %v308, %v309
    %v311 = vsub.f32 1.0, %v310
    %v312 = vmul.f32 %v309, %v311
    %v313 = vadd.f32 %v309, %v312
    %vm314 = vweird.f32 %v308
    %vm315 = vweird.f32 %v309
    %vm316 = vmor %vm314, %vm315
    %v317 = vsel %vm316, %v309, %v313
    %v318 = vand.u32 2147483647, %v308
    %vm319 = vcmp.eq.f32.partialorder %v318, 8.507059e+37
    %v320 = vand.u32 %v308, 2147483648
    %v321 = vor.u32 1.1754944e-38, %v320
    %v322 = vsel %vm319, %v321, %v317
    %v323 = vmul.f32 1.0, %v322
    %v324 = vtanh.pop %v304
    %v325 = vmul.f32 %v323, %v270
    %327 = vrot.lane.b32.xlu0 %v324, 64
    %v328 = vpop.permute.xlu0 %327
    %v330 = vmul.f32 %v323, %v328
    %332 = vrot.lane.b32.xlu0 %v330, 32
    %v333 = vpop.permute.xlu0 %332
    %v335 = vadd.f32 %v325, %v333
    %v336 = vtanh.pop %v335
    %338 = vrot.lane.b32.xlu0 %v336, 64
    %v339 = vpop.permute.xlu0 %338
    %v341 = vmul.f32 %v323, %v339
    %s342 = scalar_lea.vmem %s0, 10
    %v343 = vld [vmem:[%s342] sm:$0x3]
    %345 = vrot.lane.b32.xlu0 %v341, 32
    %v346 = vpop.permute.xlu0 %345
    %v347 = vsel %vm20, %v346, 0
    %349 = vmatpush.msra.mxu0 0.0
    %350 = vmatpush.msra.mxu0 0.0
    %351 = vmatpush.msra.mxu0 0.0
    %352 = vmatpush.msra.mxu0 0.0
    %353 = vmatpush.msra.mxu0 0.0
    %354 = vmatpush.msra.mxu0 0.0
    %355 = vmatpush.msra.mxu0 0.0
    %356 = vmatpush.msra.mxu0 0.0
    %357 = vmatpush.msra.mxu0 0.0
    %358 = vmatpush.msra.mxu0 0.0
    %359 = vmatpush.msra.mxu0 0.0
    %360 = vmatpush.msra.mxu0 0.0
    %361 = vmatpush.msra.mxu0 %v18
    %362 = vmatpush.msra.mxu0 %v17
    %363 = vmatpush.msra.mxu0 %v16
    %364 = vmatpush.msra.mxu0 %v15
    %365 = vmatmul.f32.gmra.mxu0 %v347
    %v366 = vpop.f32.mrf.mxu0
    %v367 = vadd.f32 0.0, %v366
    %368 = vdwg.mxu0
    %v369 = vadd.f32 %v343, %v367
    %v370 = vxor.u32 %v369, 2147483648
    %v371 = vmul.f32 %v370, 1.442695
    %v372 = vpow.pop %v371
    %v373 = vadd.f32 %v372, 1.0
    %v374 = vrcp.pop %v373
    %v375 = vmul.f32 %v373, %v374
    %v376 = vsub.f32 1.0, %v375
    %v377 = vmul.f32 %v374, %v376
    %v378 = vadd.f32 %v374, %v377
    %vm379 = vweird.f32 %v373
    %vm380 = vweird.f32 %v374
    %vm381 = vmor %vm379, %vm380
    %v382 = vsel %vm381, %v374, %v378
    %v383 = vand.u32 2147483647, %v373
    %vm384 = vcmp.eq.f32.partialorder %v383, 8.507059e+37
    %v385 = vand.u32 %v373, 2147483648
    %v386 = vor.u32 1.1754944e-38, %v385
    %v387 = vsel %vm384, %v386, %v382
    %v388 = vmul.f32 1.0, %v387
    %v389 = vtanh.pop %v369
    %v390 = vmul.f32 %v388, %v335
    %392 = vrot.lane.b32.xlu0 %v389, 64
    %v393 = vpop.permute.xlu0 %392
    %v395 = vmul.f32 %v388, %v393
    %397 = vrot.lane.b32.xlu0 %v395, 32
    %v398 = vpop.permute.xlu0 %397
    %v400 = vadd.f32 %v390, %v398
    %v401 = vtanh.pop %v400
    %403 = vrot.lane.b32.xlu0 %v401, 64
    %v404 = vpop.permute.xlu0 %403
    %v406 = vmul.f32 %v388, %v404
    %s407 = scalar_lea.vmem %s0, 12
    %v408 = vld [vmem:[%s407] sm:$0x3]
    %410 = vrot.lane.b32.xlu0 %v406, 32
    %v411 = vpop.permute.xlu0 %410
    %v412 = vsel %vm20, %v411, 0
    %414 = vmatpush.msra.mxu0 0.0
    %415 = vmatpush.msra.mxu0 0.0
    %416 = vmatpush.msra.mxu0 0.0
    %417 = vmatpush.msra.mxu0 0.0
    %418 = vmatpush.msra.mxu0 0.0
    %419 = vmatpush.msra.mxu0 0.0
    %420 = vmatpush.msra.mxu0 0.0
    %421 = vmatpush.msra.mxu0 0.0
    %422 = vmatpush.msra.mxu0 0.0
    %423 = vmatpush.msra.mxu0 0.0
    %424 = vmatpush.msra.mxu0 0.0
    %425 = vmatpush.msra.mxu0 0.0
    %426 = vmatpush.msra.mxu0 %v18
    %427 = vmatpush.msra.mxu0 %v17
    %428 = vmatpush.msra.mxu0 %v16
    %429 = vmatpush.msra.mxu0 %v15
    %430 = vmatmul.f32.gmra.mxu0 %v412
    %v431 = vpop.f32.mrf.mxu0
    %v432 = vadd.f32 0.0, %v431
    %433 = vdwg.mxu0
    %v434 = vadd.f32 %v408, %v432
    %v435 = vxor.u32 %v434, 2147483648
    %v436 = vmul.f32 %v435, 1.442695
    %v437 = vpow.pop %v436
    %v438 = vadd.f32 %v437, 1.0
    %v439 = vrcp.pop %v438
    %v440 = vmul.f32 %v438, %v439
    %v441 = vsub.f32 1.0, %v440
    %v442 = vmul.f32 %v439, %v441
    %v443 = vadd.f32 %v439, %v442
    %vm444 = vweird.f32 %v438
    %vm445 = vweird.f32 %v439
    %vm446 = vmor %vm444, %vm445
    %v447 = vsel %vm446, %v439, %v443
    %v448 = vand.u32 2147483647, %v438
    %vm449 = vcmp.eq.f32.partialorder %v448, 8.507059e+37
    %v450 = vand.u32 %v438, 2147483648
    %v451 = vor.u32 1.1754944e-38, %v450
    %v452 = vsel %vm449, %v451, %v447
    %v453 = vmul.f32 1.0, %v452
    %v454 = vtanh.pop %v434
    %v455 = vmul.f32 %v453, %v400
    %457 = vrot.lane.b32.xlu0 %v454, 64
    %v458 = vpop.permute.xlu0 %457
    %v460 = vmul.f32 %v453, %v458
    %462 = vrot.lane.b32.xlu0 %v460, 32
    %v463 = vpop.permute.xlu0 %462
    %v465 = vadd.f32 %v455, %v463
    %v466 = vtanh.pop %v465
    %468 = vrot.lane.b32.xlu0 %v466, 64
    %v469 = vpop.permute.xlu0 %468
    %v471 = vmul.f32 %v453, %v469
    %s472 = scalar_lea.vmem %s0, 14
    %v473 = vld [vmem:[%s472] sm:$0x3]
    %475 = vrot.lane.b32.xlu0 %v471, 32
    %v476 = vpop.permute.xlu0 %475
    %v477 = vsel %vm20, %v476, 0
    %479 = vmatpush.msra.mxu0 0.0
    %480 = vmatpush.msra.mxu0 0.0
    %481 = vmatpush.msra.mxu0 0.0
    %482 = vmatpush.msra.mxu0 0.0
    %483 = vmatpush.msra.mxu0 0.0
    %484 = vmatpush.msra.mxu0 0.0
    %485 = vmatpush.msra.mxu0 0.0
    %486 = vmatpush.msra.mxu0 0.0
    %487 = vmatpush.msra.mxu0 0.0
    %488 = vmatpush.msra.mxu0 0.0
    %489 = vmatpush.msra.mxu0 0.0
    %490 = vmatpush.msra.mxu0 0.0
    %491 = vmatpush.msra.mxu0 %v18
    %492 = vmatpush.msra.mxu0 %v17
    %493 = vmatpush.msra.mxu0 %v16
    %494 = vmatpush.msra.mxu0 %v15
    %495 = vmatmul.f32.gmra.mxu0 %v477
    %v496 = vpop.f32.mrf.mxu0
    %v497 = vadd.f32 0.0, %v496
    %498 = vdwg.mxu0
    %v499 = vadd.f32 %v473, %v497
    %v500 = vxor.u32 %v499, 2147483648
    %v501 = vmul.f32 %v500, 1.442695
    %v502 = vpow.pop %v501
    %v503 = vadd.f32 %v502, 1.0
    %v504 = vrcp.pop %v503
    %v505 = vmul.f32 %v503, %v504
    %v506 = vsub.f32 1.0, %v505
    %v507 = vmul.f32 %v504, %v506
    %v508 = vadd.f32 %v504, %v507
    %vm509 = vweird.f32 %v503
    %vm510 = vweird.f32 %v504
    %vm511 = vmor %vm509, %vm510
    %v512 = vsel %vm511, %v504, %v508
    %v513 = vand.u32 2147483647, %v503
    %vm514 = vcmp.eq.f32.partialorder %v513, 8.507059e+37
    %v515 = vand.u32 %v503, 2147483648
    %v516 = vor.u32 1.1754944e-38, %v515
    %v517 = vsel %vm514, %v516, %v512
    %v518 = vmul.f32 1.0, %v517
    %v519 = vtanh.pop %v499
    %v520 = vmul.f32 %v518, %v465
    %522 = vrot.lane.b32.xlu0 %v519, 64
    %v523 = vpop.permute.xlu0 %522
    %v525 = vmul.f32 %v518, %v523
    %527 = vrot.lane.b32.xlu0 %v525, 32
    %v528 = vpop.permute.xlu0 %527
    %v530 = vadd.f32 %v520, %v528
    %v531 = vtanh.pop %v530
    %533 = vrot.lane.b32.xlu0 %v531, 64
    %v534 = vpop.permute.xlu0 %533
    %v536 = vmul.f32 %v518, %v534
    %538 = vrot.lane.b32.xlu0 %v536, 32
    %v539 = vpop.permute.xlu0 %538
    %vm541 = vcmask 254976
    %542 = vst.msk [vmem:[#allocation2] sm:$0x3] %vm541, %v539
    %544 = vrot.lane.b32.xlu0 %v530, 96
    %v545 = vpop.permute.xlu0 %544
    %547 = vst.msk [vmem:[#allocation4] sm:$0x3] %vm541, %v545
    // Predicated region
    $region10: #{encoder_forward.1} parent=1 // pred_check
      _
    $region11: #{encoder_forward.1} parent=1 // pred_check_branch
      %549 = sbr.rel (0) target = $region13
    $region12: #{encoder_forward.1} parent=1 // pred_region
      %551 = vsyncadd [#allocation3], 0
      %s553 = sshll.u32 [#allocation2], 4
      %s554 = int_to_ptr.vmem [resolvable:$true] %s553
      %s555 = sshll.u32 %s2, 4
      %s556 = int_to_ptr.hbm [resolvable:$true] %s555
      %558 = dma.vmem_to_hbm [thread:$0]  %s554, 32, %s556, [#allocation3]
    $region13: #{encoder_forward.1} parent=1 // pred_fallthru
      _
    // Predicated region
    $region14: #{encoder_forward.1} parent=1 // pred_check
      _
    $region15: #{encoder_forward.1} parent=1 // pred_check_branch
      %560 = sbr.rel (0) target = $region17
    $region16: #{encoder_forward.1} parent=1 // pred_region
      %562 = vsyncadd [#allocation5], 0
      %s564 = sshll.u32 [#allocation4], 4
      %s565 = int_to_ptr.vmem [resolvable:$true] %s564
      %s566 = sshll.u32 %s3, 4
      %s567 = int_to_ptr.hbm [resolvable:$true] %s566
      %569 = dma.vmem_to_hbm [thread:$0]  %s565, 32, %s567, [#allocation5]
    $region17: #{encoder_forward.1} parent=1 // pred_fallthru
      _
    // Predicated region
    $region18: #{encoder_forward.1} parent=1 // pred_check
      _
    $region19: #{encoder_forward.1} parent=1 // pred_check_branch
      %571 = sbr.rel (0) target = $region21
    $region20: #{encoder_forward.1} parent=1 // pred_region
      %573 = dma.done [#allocation3], 32
    $region21: #{encoder_forward.1} parent=1 // pred_fallthru
      _
    // Predicated region
    $region22: #{encoder_forward.1} parent=1 // pred_check
      _
    $region23: #{encoder_forward.1} parent=1 // pred_check_branch
      %575 = sbr.rel (0) target = $region25
    $region24: #{encoder_forward.1} parent=1 // pred_region
      %577 = dma.done [#allocation5], 32
    $region25: #{encoder_forward.1} parent=1 // pred_fallthru
      _
    %578 = vsyncpa [#allocation3], 1
    %579 = vsyncpa [#allocation5], 1

</llo_original>
